<compile_context>
chip_gen: v6e
topology: v6e:2x2x1
jax: 0.10.0
libtpu: 0.0.40
codegen_flags: <defaults>
</compile_context>

<pallas_src>
import functools

import jax
import jax.numpy as jnp
from jax.experimental import pallas as pl
from jax.experimental.pallas import tpu as pltpu


# -----------------------------------------------------------------------------
# Pallas kernels
# -----------------------------------------------------------------------------

def _matmul_bias_kernel(a_ref, b_ref, bias_ref, o_ref, acc_ref):
    """out = (A @ B) + bias, K-reduction over grid axis 2, f32 accumulation."""
    k = pl.program_id(2)

    @pl.when(k == 0)
    def _():
        acc_ref[...] = jnp.zeros_like(acc_ref)

    acc_ref[...] += jnp.dot(a_ref[...], b_ref[...],
                            preferred_element_type=jnp.float32)

    @pl.when(k == pl.num_programs(2) - 1)
    def _():
        o_ref[...] = (acc_ref[...] + bias_ref[...]).astype(o_ref.dtype)


def _sigmoid(x):
    return 1.0 / (1.0 + jnp.exp(-x))


def _lstm_cell_kernel(xproj_ref, whh_ref, h_out_ref, h_scr, c_scr, *, hidden):
    """One LSTM time step per grid iteration (grid axis 0 = time, sequential).

    xproj_ref : (1, B, 4H)  precomputed x_t @ W_ih^T + b_ih + b_hh   (bf16)
    whh_ref   : (H, 4H)     recurrent weight, resident across steps  (bf16)
    h_out_ref : (1, B, H)   h_t output                               (bf16)
    h_scr/c_scr : (B, H) f32 VMEM scratch carrying the recurrence.
    Gate order follows PyTorch: [i, f, g, o].
    """
    t = pl.program_id(0)

    @pl.when(t == 0)
    def _():
        h_scr[...] = jnp.zeros_like(h_scr)
        c_scr[...] = jnp.zeros_like(c_scr)

    h_prev = h_scr[...]
    gates = xproj_ref[0].astype(jnp.float32) + jnp.dot(
        h_prev.astype(whh_ref.dtype), whh_ref[...],
        preferred_element_type=jnp.float32)                      # (B, 4H) f32

    i_g = _sigmoid(gates[:, 0 * hidden:1 * hidden])
    f_g = _sigmoid(gates[:, 1 * hidden:2 * hidden])
    g_g = jnp.tanh(gates[:, 2 * hidden:3 * hidden])
    o_g = _sigmoid(gates[:, 3 * hidden:4 * hidden])

    c_new = f_g * c_scr[...] + i_g * g_g
    h_new = o_g * jnp.tanh(c_new)

    c_scr[...] = c_new
    h_scr[...] = h_new
    h_out_ref[0] = h_new.astype(h_out_ref.dtype)


# -----------------------------------------------------------------------------
# Pallas wrappers
# -----------------------------------------------------------------------------

_VMEM_LIMIT = 48 * 1024 * 1024  # raised scoped VMEM, still < v7x 64 MiB physical


def _rup(x, m):
    return ((x + m - 1) // m) * m


def _pick_tile(dim, cap):
    """Return (tile, padded_dim): full-extent block when small (no padding),
    capped tile (mult. of 8/128 by construction) when large."""
    if dim <= cap:
        return dim, dim
    return cap, _rup(dim, cap)


@functools.partial(jax.jit, static_argnames=("out_dtype",))
def matmul_bias(a, b, bias, out_dtype=jnp.float32):
    """a:(M,K), b:(K,N), bias:(N,) -> (M,N).  bf16 operands, f32 accumulate,
    bias fused into the epilogue."""
    M, K = a.shape
    K2, N = b.shape
    assert K == K2
    tm, Mp = _pick_tile(M, 256)
    tn, Np = _pick_tile(N, 256)
    tk, Kp = _pick_tile(K, 512)

    a_p = a if (Mp == M and Kp == K) else jnp.pad(a, ((0, Mp - M), (0, Kp - K)))
    b_p = b if (Kp == K and Np == N) else jnp.pad(b, ((0, Kp - K), (0, Np - N)))
    bias_p = bias if Np == N else jnp.pad(bias, (0, Np - N))

    # bf16 operands feed the MXU; accumulation stays f32 inside the kernel.
    a_p = a_p.astype(jnp.bfloat16)
    b_p = b_p.astype(jnp.bfloat16)
    bias_p = bias_p.reshape(1, Np).astype(jnp.float32)

    out = pl.pallas_call(
        _matmul_bias_kernel,
        out_shape=jax.ShapeDtypeStruct((Mp, Np), out_dtype),
        grid_spec=pltpu.PrefetchScalarGridSpec(
            num_scalar_prefetch=0,
            grid=(Mp // tm, Np // tn, Kp // tk),
            in_specs=[
                pl.BlockSpec((tm, tk), lambda i, j, k: (i, k)),
                pl.BlockSpec((tk, tn), lambda i, j, k: (k, j)),
                pl.BlockSpec((1, tn), lambda i, j, k: (0, j)),
            ],
            out_specs=pl.BlockSpec((tm, tn), lambda i, j, k: (i, j)),
            scratch_shapes=[pltpu.VMEM((tm, tn), jnp.float32)],
        ),
        compiler_params=pltpu.CompilerParams(
            dimension_semantics=("parallel", "parallel", "arbitrary"),
            vmem_limit_bytes=_VMEM_LIMIT),
    )(a_p, b_p, bias_p)

    if Mp != M or Np != N:
        out = out[:M, :N]
    return out


@jax.jit
def lstm_layer(x_proj, w_hh_t):
    """x_proj:(T,B,4H) bf16 time-major gate pre-activations, w_hh_t:(H,4H) bf16.
    Returns hiddens (T,B,H) bf16.  Sequential grid over time."""
    T, B, G = x_proj.shape
    H = w_hh_t.shape[0]
    return pl.pallas_call(
        functools.partial(_lstm_cell_kernel, hidden=H),
        out_shape=jax.ShapeDtypeStruct((T, B, H), jnp.bfloat16),
        grid_spec=pltpu.PrefetchScalarGridSpec(
            num_scalar_prefetch=0,
            grid=(T,),
            in_specs=[
                pl.BlockSpec((1, B, G), lambda t: (t, 0, 0)),
                pl.BlockSpec((H, G), lambda t: (0, 0)),   # resident weight
            ],
            out_specs=pl.BlockSpec((1, B, H), lambda t: (t, 0, 0)),
            scratch_shapes=[pltpu.VMEM((B, H), jnp.float32),   # h state
                            pltpu.VMEM((B, H), jnp.float32)],  # c state
        ),
        compiler_params=pltpu.CompilerParams(
            dimension_semantics=("arbitrary",),   # recurrence: must be serial
            vmem_limit_bytes=_VMEM_LIMIT),
    )(x_proj, w_hh_t)


# -----------------------------------------------------------------------------
# DecoderRNN forward
# -----------------------------------------------------------------------------

def decoder_rnn_forward(params, features, captions):
    """features:(B,E) f32, captions:(B,Tc) int32 -> logits (B,Tc,V) f32."""
    V, E = params["embedding"].shape
    B, Tc = captions.shape

    # captions[:, :-1] -> embeddings
    caps = captions[:, :-1]                                  # (B, Tc-1)
    tok = caps.reshape(-1)                                   # (B*(Tc-1),)
    # Embedding lookup as a one-hot matmul on the MXU (small vocab).
    # TODO(synk): for a large vocab use a scalar-prefetch / DMA row gather.
    onehot = (tok[:, None] ==
              jnp.arange(V, dtype=tok.dtype)[None, :]).astype(jnp.float32)
    emb = matmul_bias(onehot, params["embedding"],
                      jnp.zeros((E,), jnp.float32))          # (B*(Tc-1), E) f32
    emb = emb.reshape(B, Tc - 1, E)

    # inputs = cat([features.unsqueeze(1), embeddings], dim=1)
    inputs = jnp.concatenate(
        [features[:, None, :].astype(jnp.float32), emb], axis=1)   # (B, T, E)
    T = Tc

    # time-major for the recurrent kernel
    cur = jnp.transpose(inputs, (1, 0, 2))                   # (T, B, E)

    for layer in params["lstm"]:
        D = cur.shape[-1]
        # All-timestep input projection as one big MXU matmul (bias folded).
        xproj = matmul_bias(cur.reshape(T * B, D).astype(jnp.float32),
                            layer["w_ih_t"], layer["bias"],
                            out_dtype=jnp.bfloat16)          # (T*B, 4H) bf16
        xproj = xproj.reshape(T, B, -1)
        cur = lstm_layer(xproj, layer["w_hh_t"].astype(jnp.bfloat16))  # (T,B,H)

    H = cur.shape[-1]
    logits = matmul_bias(cur.reshape(T * B, H).astype(jnp.float32),
                         params["w_out_t"], params["b_out"])  # (T*B, V) f32
    logits = logits.reshape(T, B, V)
    return jnp.transpose(logits, (1, 0, 2))                  # (B, T, V)


# -----------------------------------------------------------------------------
# Deterministic parameter construction (shapes follow the PyTorch module)
# -----------------------------------------------------------------------------

class _KeyGen:
    def __init__(self, key):
        self.key = key
        self.i = 0

    def __call__(self):
        self.i += 1
        return jax.random.fold_in(self.key, self.i)


def init_params(key, embed_size, hidden_size, vocab_size, num_layers=1):
    kg = _KeyGen(key)
    E, H, V = embed_size, hidden_size, vocab_size
    bound = 1.0 / (H ** 0.5)

    params = {"embedding": jax.random.normal(kg(), (V, E), jnp.float32)}

    lstm = []
    for layer in range(num_layers):
        in_dim = E if layer == 0 else H
        w_ih_t = jax.random.uniform(kg(), (in_dim, 4 * H), jnp.float32,
                                    -bound, bound)
        w_hh_t = jax.random.uniform(kg(), (H, 4 * H), jnp.float32,
                                    -bound, bound)
        b_ih = jax.random.uniform(kg(), (4 * H,), jnp.float32, -bound, bound)
        b_hh = jax.random.uniform(kg(), (4 * H,), jnp.float32, -bound, bound)
        lstm.append({"w_ih_t": w_ih_t, "w_hh_t": w_hh_t,
                     "bias": b_ih + b_hh})   # fold both LSTM biases
    params["lstm"] = lstm

    # nn.Linear(hidden_size, vocab_size): stored transposed (H, V)
    params["w_out_t"] = jax.random.uniform(kg(), (H, V), jnp.float32,
                                           -bound, bound)
    params["b_out"] = jax.random.uniform(kg(), (V,), jnp.float32,
                                         -bound, bound)
    return params


# -----------------------------------------------------------------------------

if __name__ == "__main__":
    key = jax.random.PRNGKey(0)
    embed_size, hidden_size, vocab_size = 32, 32, 128
    batch, cap_len = 2, 8

    params = init_params(key, embed_size, hidden_size, vocab_size, num_layers=1)

    features = jax.random.normal(jax.random.fold_in(key, 101),
                                 (batch, embed_size), jnp.float32)
    captions = jax.random.randint(jax.random.fold_in(key, 202),
                                  (batch, cap_len), 0, vocab_size,
                                  dtype=jnp.int32)

    out = decoder_rnn_forward(params, features, captions)
    out = jax.block_until_ready(out)

    assert out.shape == (batch, cap_len, vocab_size), out.shape
    assert bool(jnp.all(jnp.isfinite(out)))
    print("KERNEL_OK")
</pallas_src>

<mosaic_0001>
module attributes {stable_mosaic.version = 11 : i64} {
  func.func @_matmul_bias_kernel(%arg0: i32, %arg1: i32, %arg2: i32, %arg3: memref<14x128xbf16, #tpu.memory_space<vmem>>, %arg4: memref<128x32xbf16, #tpu.memory_space<vmem>>, %arg5: memref<1x32xf32, #tpu.memory_space<vmem>>, %arg6: memref<14x32xf32, #tpu.memory_space<vmem>>, %arg7: memref<14x32xf32, #tpu.memory_space<vmem>>) attributes {dimension_semantics = [#tpu.dimension_semantics<parallel>, #tpu.dimension_semantics<parallel>, #tpu.dimension_semantics<arbitrary>], iteration_bounds = array<i64: 1, 1, 1>, scalar_prefetch = 0 : i64, scratch_operands = 1 : i64, tpu.core_type = #tpu.core_type<tc>, window_params = [{transform_indices = @transform_0, window_bounds = array<i64: 14, 128>}, {transform_indices = @transform_1, window_bounds = array<i64: 128, 32>}, {transform_indices = @transform_2, window_bounds = array<i64: 1, 32>}, {transform_indices = @transform_3, window_bounds = array<i64: 14, 32>}]} {
    %c0_i32 = arith.constant 0 : i32
    %0 = arith.cmpi eq, %arg2, %c0_i32 : i32
    %1 = arith.extui %0 : i1 to i32
    %c0_i32_0 = arith.constant 0 : i32
    %2 = arith.cmpi ne, %1, %c0_i32_0 : i32
    scf.if %2 {
      %cst_10 = arith.constant 0.000000e+00 : f32
      %12 = vector.broadcast %cst_10 : f32 to vector<14x32xf32>
      %c0_11 = arith.constant 0 : index
      %c0_12 = arith.constant 0 : index
      %13 = vector.load %arg7[%c0_11, %c0_12] : memref<14x32xf32, #tpu.memory_space<vmem>>, vector<14x32xf32>
      tpu.vector_store %arg7[%c0_11, %c0_12], %12 {strides = array<i32>} : memref<14x32xf32, #tpu.memory_space<vmem>>, vector<14x32xf32>,
    } else {
    }
    %c0 = arith.constant 0 : index
    %c0_1 = arith.constant 0 : index
    %3 = vector.load %arg7[%c0, %c0_1] : memref<14x32xf32, #tpu.memory_space<vmem>>, vector<14x32xf32>
    %c0_2 = arith.constant 0 : index
    %c0_3 = arith.constant 0 : index
    %4 = vector.load %arg3[%c0_2, %c0_3] : memref<14x128xbf16, #tpu.memory_space<vmem>>, vector<14x128xbf16>
    %c0_4 = arith.constant 0 : index
    %c0_5 = arith.constant 0 : index
    %5 = vector.load %arg4[%c0_4, %c0_5] : memref<128x32xbf16, #tpu.memory_space<vmem>>, vector<128x32xbf16>
    %cst = arith.constant dense<0.000000e+00> : vector<14x32xf32>
    %6 = tpu.matmul %4, %5, %cst {dimension_numbers = #tpu.dot_dimension_numbers<[1], [0], [0], [1], [0, 0, 1, 1], [], []>} : vector<14x128xbf16>, vector<128x32xbf16>, vector<14x32xf32> -> vector<14x32xf32>
    %7 = arith.addf %3, %6 : vector<14x32xf32>
    %c0_6 = arith.constant 0 : index
    %c0_7 = arith.constant 0 : index
    %8 = vector.load %arg7[%c0_6, %c0_7] : memref<14x32xf32, #tpu.memory_space<vmem>>, vector<14x32xf32>
    tpu.vector_store %arg7[%c0_6, %c0_7], %7 {strides = array<i32>} : memref<14x32xf32, #tpu.memory_space<vmem>>, vector<14x32xf32>,
    %c0_i32_8 = arith.constant 0 : i32
    %9 = arith.cmpi eq, %arg2, %c0_i32_8 : i32
    %10 = arith.extui %9 : i1 to i32
    %c0_i32_9 = arith.constant 0 : i32
    %11 = arith.cmpi ne, %10, %c0_i32_9 : i32
    scf.if %11 {
      %c0_10 = arith.constant 0 : index
      %c0_11 = arith.constant 0 : index
      %12 = vector.load %arg7[%c0_10, %c0_11] : memref<14x32xf32, #tpu.memory_space<vmem>>, vector<14x32xf32>
      %c0_12 = arith.constant 0 : index
      %c0_13 = arith.constant 0 : index
      %13 = vector.load %arg5[%c0_12, %c0_13] : memref<1x32xf32, #tpu.memory_space<vmem>>, vector<1x32xf32>
      %14 = vector.broadcast %13 : vector<1x32xf32> to vector<14x32xf32>
      %15 = arith.addf %12, %14 : vector<14x32xf32>
      %c0_14 = arith.constant 0 : index
      %c0_15 = arith.constant 0 : index
      %16 = vector.load %arg6[%c0_14, %c0_15] : memref<14x32xf32, #tpu.memory_space<vmem>>, vector<14x32xf32>
      tpu.vector_store %arg6[%c0_14, %c0_15], %15 {strides = array<i32>} : memref<14x32xf32, #tpu.memory_space<vmem>>, vector<14x32xf32>,
    } else {
    }
    return
  }
  func.func @transform_0(%arg0: i32, %arg1: i32, %arg2: i32) -> (i32, i32) {
    %c0_i32 = arith.constant 0 : i32
    return %arg0, %arg2 : i32, i32
  }
  func.func @transform_1(%arg0: i32, %arg1: i32, %arg2: i32) -> (i32, i32) {
    %c0_i32 = arith.constant 0 : i32
    return %arg2, %arg1 : i32, i32
  }
  func.func @transform_2(%arg0: i32, %arg1: i32, %arg2: i32) -> (i32, i32) {
    %c0_i32 = arith.constant 0 : i32
    %c0_i32_0 = arith.constant 0 : i32
    return %c0_i32, %arg1 : i32, i32
  }
  func.func @transform_3(%arg0: i32, %arg1: i32, %arg2: i32) -> (i32, i32) {
    %c0_i32 = arith.constant 0 : i32
    return %arg0, %arg1 : i32, i32
  }
}

</mosaic_0001>

<llo_original>
// kernel: matmul_bias.1
$region0: #{matmul_bias.1}
  #allocation0 [shape = 'u32[]', space=smem, size = 0x4, offset = 0x4, fixed_abs, tag = 'smem constant byte address 0x4 - core index']
  #allocation1 [shape = 'u32[144,128]{1,0:T(1,128)}', space=vmem, size = 0x12000, scoped, tag = 'internal scratch']
  #allocation2 [shape = 'f32[14,32]{1,0:T(8,128)}', space=vmem, size = 0x2000, scoped, tag = 'scratch operand']
  %s0 = inlined_call_operand.vmem [shape: bf16[14,128], index: 0, kind: input, shape index: {}]
  %s1 = inlined_call_operand.vmem [shape: bf16[128,32], index: 1, kind: input, shape index: {}]
  %s2 = inlined_call_operand.vmem [shape: f32[1,32], index: 2, kind: input, shape index: {}]
  %s3 = inlined_call_operand.hbm [shape: f32[14,32], index: 3, kind: output, shape index: {}]
  %s4 = sld [smem:[#allocation0]]
  $region30: #{matmul_bias.1} parent=0
    _
  %s6 = ssub.s32 1, %s4
  %s7 = scalar_select 0, %s6, %s4
  $region1: #{matmul_bias.1} parent=0
    #allocation3 [shape = 'u8[8192]{0}', space=vmem, size = 0x2000, scoped, tag = 'output window, operand 0, single buffered']
    #allocation4 [shape = 's32[1]{0}', space=sflag, size = 0x4, scoped, tag = 'scoped memory for matmul_bias.1']
    %8 = vsyncpa [#allocation4], 0
    // Predicated region
    $region2: #{matmul_bias.1} parent=1 // pred_check
      _
    $region3: #{matmul_bias.1} parent=1 // pred_check_branch
      %10 = sbr.rel (0) target = $region5
    $region4: #{matmul_bias.1} parent=1 // pred_region
      _
    $region5: #{matmul_bias.1} parent=1 // pred_fallthru
      _
    // Predicated region
    $region6: #{matmul_bias.1} parent=1 // pred_check
      _
    $region7: #{matmul_bias.1} parent=1 // pred_check_branch
      %12 = sbr.rel (0) target = $region9
    $region8: #{matmul_bias.1} parent=1 // pred_region
      _
    $region9: #{matmul_bias.1} parent=1 // pred_fallthru
      _
    // Predicated region
    $region10: #{matmul_bias.1} parent=1 // pred_check
      _
    $region11: #{matmul_bias.1} parent=1 // pred_check_branch
      %14 = sbr.rel (0) target = $region13
    $region12: #{matmul_bias.1} parent=1 // pred_region
      _
    $region13: #{matmul_bias.1} parent=1 // pred_fallthru
      _
    %p16 = scmp.eq.s32.totalorder 0, 0
    // Predicated region
    $region14: #{matmul_bias.1} parent=1 // pred_check
      %p17 = pneg %p16
    $region15: #{matmul_bias.1} parent=1 // pred_check_branch
      %19 = sbr.rel (%p17) target = $region17
    $region16: #{matmul_bias.1} parent=1 // pred_region
      %vm20 = vcmask 261120
      %21 = vst.msk [vmem:[#allocation2] sm:$0xff] %vm20, 0.0
      %vm22 = vcmask 259072
      %23 = vst.msk [vmem:[#allocation2 + $0x8] sm:$0x3f] %vm22, 0.0
    $region17: #{matmul_bias.1} parent=1 // pred_fallthru
      _
    %v24 = vld [vmem:[#allocation2] sm:$0xff]
    %v25 = vld [vmem:[#allocation2 + $0x8] sm:$0x3f]
    %v26 = vld [vmem:[%s0] sm:$0xf]
    %v27 = vld [vmem:[%s0 + $0x4] sm:$0x7]
    %v28 = vld [vmem:[%s1] sm:$0xf]
    %v29 = vld [vmem:[%s1 + $0x4] sm:$0xf]
    %v30 = vld [vmem:[%s1 + $0x8] sm:$0xf]
    %v31 = vld [vmem:[%s1 + $0xc] sm:$0xf]
    %v32 = vld [vmem:[%s1 + $0x10] sm:$0xf]
    %v33 = vld [vmem:[%s1 + $0x14] sm:$0xf]
    %v34 = vld [vmem:[%s1 + $0x18] sm:$0xf]
    %v35 = vld [vmem:[%s1 + $0x1c] sm:$0xf]
    %v36 = vld [vmem:[%s1 + $0x20] sm:$0xf]
    %v37 = vld [vmem:[%s1 + $0x24] sm:$0xf]
    %v38 = vld [vmem:[%s1 + $0x28] sm:$0xf]
    %v39 = vld [vmem:[%s1 + $0x2c] sm:$0xf]
    %v40 = vld [vmem:[%s1 + $0x30] sm:$0xf]
    %v41 = vld [vmem:[%s1 + $0x34] sm:$0xf]
    %v42 = vld [vmem:[%s1 + $0x38] sm:$0xf]
    %v43 = vld [vmem:[%s1 + $0x3c] sm:$0xf]
    %v46 = vunpack.c.l.b16 %v26
    %v47 = vunpack.c.l.b16 %v27
    %v48 = vpack.c.b16 %v47, %v46
    %v66 = vunpack.c.l.b16 %v28
    %v67 = vunpack.c.l.b16 %v29
    %v68 = vunpack.c.l.b16 %v30
    %v69 = vunpack.c.l.b16 %v31
    %v70 = vunpack.c.l.b16 %v32
    %v71 = vunpack.c.l.b16 %v33
    %v72 = vunpack.c.l.b16 %v34
    %v73 = vunpack.c.l.b16 %v35
    %v74 = vunpack.c.l.b16 %v36
    %v75 = vunpack.c.l.b16 %v37
    %v76 = vunpack.c.l.b16 %v38
    %v77 = vunpack.c.l.b16 %v39
    %v78 = vunpack.c.l.b16 %v40
    %v79 = vunpack.c.l.b16 %v41
    %v80 = vunpack.c.l.b16 %v42
    %v81 = vunpack.c.l.b16 %v43
    %v82 = vpack.c.b16 %v67, %v66
    %v83 = vpack.c.b16 %v69, %v68
    %v84 = vpack.c.b16 %v71, %v70
    %v85 = vpack.c.b16 %v73, %v72
    %v86 = vpack.c.b16 %v75, %v74
    %v87 = vpack.c.b16 %v77, %v76
    %v88 = vpack.c.b16 %v79, %v78
    %v89 = vpack.c.b16 %v81, %v80
    %98 = vmatprep.subr.bf16.mxu0 0
    %99 = vmatpush1.bf16.msra.mxu0 %v89
    %100 = vmatprep.subr.bf16.mxu0 0
    %101 = vmatpush1.bf16.msra.mxu0 %v88
    %102 = vmatprep.subr.bf16.mxu0 0
    %103 = vmatpush1.bf16.msra.mxu0 %v87
    %104 = vmatprep.subr.bf16.mxu0 0
    %105 = vmatpush1.bf16.msra.mxu0 %v86
    %106 = vmatprep.subr.bf16.mxu0 0
    %107 = vmatpush1.bf16.msra.mxu0 %v85
    %108 = vmatprep.subr.bf16.mxu0 0
    %109 = vmatpush1.bf16.msra.mxu0 %v84
    %110 = vmatprep.subr.bf16.mxu0 0
    %111 = vmatpush1.bf16.msra.mxu0 %v83
    %112 = vmatprep.subr.bf16.mxu0 0
    %113 = vmatpush1.bf16.msra.mxu0 %v82
    %114 = vmatprep.subr.bf16.mxu0 0
    %115 = vmatpush2.bf16.msra.mxu0 0
    %116 = vmatprep.subr.bf16.mxu0 0
    %117 = vmatpush2.bf16.msra.mxu0 0
    %118 = vmatprep.subr.bf16.mxu0 0
    %119 = vmatpush2.bf16.msra.mxu0 0
    %120 = vmatprep.subr.bf16.mxu0 0
    %121 = vmatpush2.bf16.msra.mxu0 0
    %122 = vmatprep.subr.bf16.mxu0 0
    %123 = vmatpush2.bf16.msra.mxu0 0
    %124 = vmatprep.subr.bf16.mxu0 0
    %125 = vmatpush2.bf16.msra.mxu0 0
    %126 = vmatprep.subr.bf16.mxu0 0
    %127 = vmatpush2.bf16.msra.mxu0 0
    %128 = vmatprep.subr.bf16.mxu0 0
    %129 = vmatpush2.bf16.msra.mxu0 0
    %130 = vmatprep.mubr.bf16.mxu0 0
    %131 = vmatmul.mubr.bf16.gmra.mxu0 %v48
    %v132 = vpop.f32.mrf.mxu0
    %v133 = vadd.f32 0.0, %v132
    %v134 = vpop.f32.mrf.mxu0
    %v135 = vpop.f32.mrf.mxu0
    %v136 = vadd.f32 0.0, %v135
    %v137 = vpop.f32.mrf.mxu0
    %138 = vdwg.mxu0
    %v139 = vadd.f32 %v24, %v133
    %v140 = vadd.f32 %v25, %v136
    %vm141 = vcmask 261120
    %142 = vst.msk [vmem:[#allocation2] sm:$0xff] %vm141, %v139
    %vm143 = vcmask 259072
    %144 = vst.msk [vmem:[#allocation2 + $0x8] sm:$0x3f] %vm143, %v140
    // Predicated region
    $region18: #{matmul_bias.1} parent=1 // pred_check
      %p145 = pneg %p16
    $region19: #{matmul_bias.1} parent=1 // pred_check_branch
      %147 = sbr.rel (%p145) target = $region21
    $region20: #{matmul_bias.1} parent=1 // pred_region
      %v148 = vld [vmem:[#allocation2] sm:$0xff]
      %v149 = vld [vmem:[#allocation2 + $0x8] sm:$0x3f]
      %v150 = vld [vmem:[%s2] sm:$0x1]
      %v152 = vlaneseq
      %v153 = vshrl.u32 %v152, 7
      %v154 = vsub.s32 0, %v153
      %v155 = vrot.slane %v150, %v154
      %v157 = vadd.f32 %v148, %v155
      %v158 = vadd.f32 %v149, %v155
      %159 = vst.msk [vmem:[#allocation3] sm:$0xff] %vm141, %v157
      %160 = vst.msk [vmem:[#allocation3 + $0x8] sm:$0x3f] %vm143, %v158
    $region21: #{matmul_bias.1} parent=1 // pred_fallthru
      _
    // Predicated region
    $region22: #{matmul_bias.1} parent=1 // pred_check
      _
    $region23: #{matmul_bias.1} parent=1 // pred_check_branch
      %162 = sbr.rel (0) target = $region25
    $region24: #{matmul_bias.1} parent=1 // pred_region
      %s164 = ssub.s32 256, 256
      %165 = vsyncadd [#allocation4], %s164
      %s166 = sshll.u32 [#allocation3], 4
      %s167 = int_to_ptr.vmem [resolvable:$true] %s166
      %172 = dma.vmem_to_hbm [thread:$0]  %s167, 256, %s3, [#allocation4], 128, 128, 8
    $region25: #{matmul_bias.1} parent=1 // pred_fallthru
      _
    // Predicated region
    $region26: #{matmul_bias.1} parent=1 // pred_check
      _
    $region27: #{matmul_bias.1} parent=1 // pred_check_branch
      %174 = sbr.rel (0) target = $region29
    $region28: #{matmul_bias.1} parent=1 // pred_region
      %175 = dma.done [#allocation4], 256
    $region29: #{matmul_bias.1} parent=1 // pred_fallthru
      _
    %176 = vsyncpa [#allocation4], 1

</llo_original>
